<compile_context>
chip_gen: v7x
topology: tpu7x:2x2x1
jax: 0.10.0
libtpu: 0.0.40
codegen_flags: <defaults>
</compile_context>

<pallas_src>
import functools

import jax
import jax.numpy as jnp
from jax.experimental import pallas as pl
from jax.experimental.pallas import tpu as pltpu


# ----------------------------------------------------------------- helpers ---
def _round_up(x, m):
    return (x + m - 1) // m * m


def _pick_tile_m(n_pad, din_pad, dout_pad, vmem_budget_bytes=12 * 1024 * 1024):
    """Largest row tile dividing n_pad that fits a conservative VMEM budget.

    Budget accounts for: double-buffered bf16 (TM, N) A_hat tiles, resident
    bf16 H and W, double-buffered f32 (TM, Dout) output tiles.  12 MiB default
    stays under v5e's 16 MiB default scoped VMEM; raise toward 64-96 MiB on
    v6e (128 MiB physical) via this arg + pltpu.CompilerParams(vmem_limit_bytes),
    keep <=~28 MiB on v7x (64 MiB physical, 32 MiB default scoped).
    """
    fixed = n_pad * din_pad * 2 + din_pad * dout_pad * 2 + 8 * dout_pad * 4
    for tm in (1024, 512, 256, 128, 64, 32, 16, 8):
        if n_pad % tm != 0:
            continue
        need = fixed + 2 * tm * n_pad * 2 + 4 * tm * dout_pad * 4
        if need <= vmem_budget_bytes:
            return tm
    return 8


# ----------------------------------------------------------------- kernels ---
def _gcn_stats_kernel(a_ref, h_ref, w_ref, b_ref, z_ref, stats_ref, *, tm, n_real):
    """Pass 1: Z_tile = (A_tile @ H) @ W + b  +  masked per-tile BN partials."""
    i = pl.program_id(0)
    # bf16 matmuls, f32 accumulation (MXU).
    # NOTE: for general layer dims compute H @ W first when Dout < Din; with
    # 128-lane padding both orders cost the same here.
    m = jnp.dot(a_ref[...], h_ref[...], preferred_element_type=jnp.float32)
    z = jnp.dot(m.astype(jnp.bfloat16), w_ref[...],
                preferred_element_type=jnp.float32)
    z = z + b_ref[...]
    z_ref[...] = z

    # masked partial sum / sum-of-squares over REAL node rows only
    row = jax.lax.broadcasted_iota(jnp.int32, (tm, 1), 0) + i * tm
    valid = (row < n_real).astype(jnp.float32)
    zv = z * valid
    s = jnp.sum(zv, axis=0, keepdims=True)            # (1, Dpad)
    sq = jnp.sum(zv * zv, axis=0, keepdims=True)      # (1, Dpad)
    stats_ref[...] = jnp.stack([s, sq], axis=1)       # (1, 2, Dpad)


def _bn_elu_kernel(z_ref, mean_ref, inv_ref, g_ref, beta_ref, o_ref):
    """Pass 2: BatchNorm affine transform + ELU (alpha=1), f32 math."""
    z = z_ref[...]
    zn = (z - mean_ref[...]) * (inv_ref[...] * g_ref[...]) + beta_ref[...]
    o_ref[...] = jnp.where(zn > 0, zn, jnp.expm1(jnp.minimum(zn, 0.0))
                           ).astype(o_ref.dtype)


def _gcn_elu_kernel(a_ref, h_ref, w_ref, b_ref, o_ref):
    """No-norm layer: Z = (A_tile @ H) @ W + b, then ELU, fused."""
    m = jnp.dot(a_ref[...], h_ref[...], preferred_element_type=jnp.float32)
    z = jnp.dot(m.astype(jnp.bfloat16), w_ref[...],
                preferred_element_type=jnp.float32)
    z = z + b_ref[...]
    o_ref[...] = jnp.where(z > 0, z, jnp.expm1(jnp.minimum(z, 0.0))
                           ).astype(o_ref.dtype)


# ------------------------------------------------------------- layer driver ---
def gcn_layer(a_hat_p, h_p, w_p, b_p, gamma_p, beta_p, *,
              n_real, apply_norm, out_dtype):
    """One GCN layer on padded operands.  Row-tiled grid, bf16 matmuls."""
    n_pad = a_hat_p.shape[0]
    din_pad = h_p.shape[1]
    dout_pad = w_p.shape[1]
    tm = _pick_tile_m(n_pad, din_pad, dout_pad)
    grid = (n_pad // tm,)
    cparams = pltpu.CompilerParams(dimension_semantics=("parallel",))

    a_spec = pl.BlockSpec((tm, n_pad), lambda i: (i, 0))
    h_spec = pl.BlockSpec((n_pad, din_pad), lambda i: (0, 0))
    w_spec = pl.BlockSpec((din_pad, dout_pad), lambda i: (0, 0))
    vec_spec = pl.BlockSpec((1, dout_pad), lambda i: (0, 0))
    row_spec = pl.BlockSpec((tm, dout_pad), lambda i: (i, 0))

    if not apply_norm:
        return pl.pallas_call(
            _gcn_elu_kernel,
            grid=grid,
            out_shape=jax.ShapeDtypeStruct((n_pad, dout_pad), out_dtype),
            in_specs=[a_spec, h_spec, w_spec, vec_spec],
            out_specs=row_spec,
            compiler_params=cparams,
        )(a_hat_p, h_p, w_p, b_p)

    # pass 1: matmuls + masked per-tile BN partial statistics
    z, stats = pl.pallas_call(
        functools.partial(_gcn_stats_kernel, tm=tm, n_real=n_real),
        grid=grid,
        out_shape=(jax.ShapeDtypeStruct((n_pad, dout_pad), jnp.float32),
                   jax.ShapeDtypeStruct((grid[0], 2, dout_pad), jnp.float32)),
        in_specs=[a_spec, h_spec, w_spec, vec_spec],
        out_specs=(row_spec, pl.BlockSpec((1, 2, dout_pad), lambda i: (i, 0, 0))),
        compiler_params=cparams,
    )(a_hat_p, h_p, w_p, b_p)

    # tiny (num_tiles x Dout) reduction: batch mean / inv-std (biased var,
    # eps=1e-5, PyTorch BatchNorm1d training-mode statistics)
    s = jnp.sum(stats[:, 0, :], axis=0)
    sq = jnp.sum(stats[:, 1, :], axis=0)
    mean = (s / n_real)[None, :]
    var = jnp.maximum(sq / n_real - mean[0] ** 2, 0.0)[None, :]
    inv = jax.lax.rsqrt(var + 1e-5)

    # pass 2: apply BN + ELU, tiled over rows
    return pl.pallas_call(
        _bn_elu_kernel,
        grid=grid,
        out_shape=jax.ShapeDtypeStruct((n_pad, dout_pad), out_dtype),
        in_specs=[row_spec, vec_spec, vec_spec, vec_spec, vec_spec],
        out_specs=row_spec,
        compiler_params=cparams,
    )(z, mean, inv, gamma_p, beta_p)


# -------------------------------------------------------------------- glue ---
def build_norm_adj(edge_index, n):
    """Dense D^-1/2 (A + I) D^-1/2 from a [2, E] edge_index (f32)."""
    src, dst = edge_index[0], edge_index[1]
    a = jnp.zeros((n, n), jnp.float32)
    a = a.at[dst, src].set(1.0)                     # NOTE: multi-edges dedup'd
    a = jnp.maximum(a, jnp.eye(n, dtype=jnp.float32))   # self-loops
    deg = jnp.sum(a, axis=1)
    d_inv_sqrt = jax.lax.rsqrt(deg)
    return a * d_inv_sqrt[:, None] * d_inv_sqrt[None, :]


def init_params(key, layer_dim):
    """W ~ N(0, 1/fan_in), b=0, gamma=1, beta=0."""
    params = []
    for i in range(len(layer_dim) - 1):
        d_in, d_out = layer_dim[i], layer_dim[i + 1]
        key, sub = jax.random.split(key)
        w = jax.random.normal(sub, (d_in, d_out), jnp.float32) / jnp.sqrt(
            jnp.float32(d_in))
        params.append({
            "w": w,
            "b": jnp.zeros((1, d_out), jnp.float32),
            "gamma": jnp.ones((1, d_out), jnp.float32),
            "beta": jnp.zeros((1, d_out), jnp.float32),
        })
    return params


def gnn_layers_forward(x, edge_index, params, *, last_norm=False):
    """GNNLayers.forward: norm='batchnorm', activation='elu', res=False,
    dropout treated as identity (p=0 / eval)."""
    n, din = x.shape
    n_pad = _round_up(max(n, 8), 128)
    din_pad = _round_up(din, 128)

    # normalized adjacency: build in f32, pad, keep bf16 (halves repeated reads)
    a = build_norm_adj(edge_index, n)
    a_p = jnp.zeros((n_pad, n_pad), jnp.float32).at[:n, :n].set(a)
    a_p = a_p.astype(jnp.bfloat16)

    # node features: zero-pad nodes + lanes, bf16 for the MXU
    h = jnp.zeros((n_pad, din_pad), jnp.bfloat16).at[:n, :din].set(
        x.astype(jnp.bfloat16))

    num_layers = len(params)
    d_out = din
    for l, p in enumerate(params):
        d_in, d_out = p["w"].shape
        d_in_pad = _round_up(d_in, 128)
        d_out_pad = _round_up(d_out, 128)
        w_p = jnp.zeros((d_in_pad, d_out_pad), jnp.bfloat16).at[:d_in, :d_out].set(
            p["w"].astype(jnp.bfloat16))
        b_p = jnp.zeros((1, d_out_pad), jnp.float32).at[:, :d_out].set(p["b"])
        g_p = jnp.zeros((1, d_out_pad), jnp.float32).at[:, :d_out].set(p["gamma"])
        be_p = jnp.zeros((1, d_out_pad), jnp.float32).at[:, :d_out].set(p["beta"])

        apply_norm = (l < num_layers - 1) or last_norm
        is_last = (l == num_layers - 1)
        out_dtype = jnp.float32 if is_last else jnp.bfloat16
        h = gcn_layer(a_p, h, w_p, b_p, g_p, be_p,
                      n_real=n, apply_norm=apply_norm, out_dtype=out_dtype)

    return h[:n, :d_out].astype(jnp.float32)


def reference_forward(x, edge_index, params, *, last_norm=False):
    """Pure-JAX f32 reference (dense GCN + training-mode BN + ELU)."""
    n = x.shape[0]
    a = build_norm_adj(edge_index, n)
    h = x
    num_layers = len(params)
    for l, p in enumerate(params):
        z = (a @ h) @ p["w"] + p["b"]
        if (l < num_layers - 1) or last_norm:
            mean = jnp.mean(z, axis=0, keepdims=True)
            var = jnp.mean((z - mean) ** 2, axis=0, keepdims=True)
            z = (z - mean) * jax.lax.rsqrt(var + 1e-5) * p["gamma"] + p["beta"]
        h = jnp.where(z > 0, z, jnp.expm1(jnp.minimum(z, 0.0)))
    return h


# -------------------------------------------------------------------- main ---
if __name__ == "__main__":
    key = jax.random.PRNGKey(0)
    n_nodes = 300          # pads to 384 -> 3 row tiles of 128 (exercises mask)
    n_edges = 900
    layer_dim = [16, 32, 32]   # 2 GNN layers

    k_x, k_e, k_p = jax.random.split(key, 3)
    x = jax.random.normal(k_x, (n_nodes, layer_dim[0]), jnp.float32)
    edge_index = jax.random.randint(k_e, (2, n_edges), 0, n_nodes,
                                    dtype=jnp.int32)
    params = init_params(k_p, layer_dim)

    out = gnn_layers_forward(x, edge_index, params, last_norm=False)
    out = jax.block_until_ready(out)

    assert out.shape == (n_nodes, layer_dim[-1])
    assert bool(jnp.all(jnp.isfinite(out)))

    # loose tolerance vs f32 reference (bf16 matmul operands, f32 accumulation)
    ref = reference_forward(x, edge_index, params, last_norm=False)
    max_err = float(jnp.max(jnp.abs(out - ref)))
    assert max_err < 0.25, f"max abs err vs reference = {max_err}"

    print("KERNEL_OK")
</pallas_src>

<mosaic_0001>
module attributes {stable_mosaic.version = 11 : i64} {
  func.func @_gcn_stats_kernel(%arg0: i32, %arg1: memref<128x384xbf16, #tpu.memory_space<vmem>>, %arg2: memref<384x128xbf16, #tpu.memory_space<vmem>>, %arg3: memref<128x128xbf16, #tpu.memory_space<vmem>>, %arg4: memref<1x128xf32, #tpu.memory_space<vmem>>, %arg5: memref<128x128xf32, #tpu.memory_space<vmem>>, %arg6: memref<1x2x128xf32, #tpu.memory_space<vmem>>) attributes {dimension_semantics = [#tpu.dimension_semantics<parallel>], iteration_bounds = array<i64: 3>, scalar_prefetch = 0 : i64, scratch_operands = 0 : i64, tpu.core_type = #tpu.core_type<tc>, window_params = [{transform_indices = @transform_0, window_bounds = array<i64: 128, 384>}, {pipeline_mode = #tpu.pipeline_mode<synchronous>, transform_indices = @transform_1, window_bounds = array<i64: 384, 128>}, {pipeline_mode = #tpu.pipeline_mode<synchronous>, transform_indices = @transform_2, window_bounds = array<i64: 128, 128>}, {pipeline_mode = #tpu.pipeline_mode<synchronous>, transform_indices = @transform_3, window_bounds = array<i64: 1, 128>}, {transform_indices = @transform_4, window_bounds = array<i64: 128, 128>}, {transform_indices = @transform_5, window_bounds = array<i64: 1, 2, 128>}]} {
    %c0 = arith.constant 0 : index
    %c0_0 = arith.constant 0 : index
    %0 = vector.load %arg1[%c0, %c0_0] : memref<128x384xbf16, #tpu.memory_space<vmem>>, vector<128x384xbf16>
    %c0_1 = arith.constant 0 : index
    %c0_2 = arith.constant 0 : index
    %1 = vector.load %arg2[%c0_1, %c0_2] : memref<384x128xbf16, #tpu.memory_space<vmem>>, vector<384x128xbf16>
    %cst = arith.constant dense<0.000000e+00> : vector<128x128xf32>
    %2 = tpu.matmul %0, %1, %cst {dimension_numbers = #tpu.dot_dimension_numbers<[1], [0], [0], [1], [0, 0, 1, 1], [], []>} : vector<128x384xbf16>, vector<384x128xbf16>, vector<128x128xf32> -> vector<128x128xf32>
    %3 = arith.truncf %2 : vector<128x128xf32> to vector<128x128xbf16>
    %c0_3 = arith.constant 0 : index
    %c0_4 = arith.constant 0 : index
    %4 = vector.load %arg3[%c0_3, %c0_4] : memref<128x128xbf16, #tpu.memory_space<vmem>>, vector<128x128xbf16>
    %cst_5 = arith.constant dense<0.000000e+00> : vector<128x128xf32>
    %5 = tpu.matmul %3, %4, %cst_5 {dimension_numbers = #tpu.dot_dimension_numbers<[1], [0], [0], [1], [0, 0, 1, 1], [], []>} : vector<128x128xbf16>, vector<128x128xbf16>, vector<128x128xf32> -> vector<128x128xf32>
    %c0_6 = arith.constant 0 : index
    %c0_7 = arith.constant 0 : index
    %6 = vector.load %arg4[%c0_6, %c0_7] : memref<1x128xf32, #tpu.memory_space<vmem>>, vector<1x128xf32>
    %7 = vector.broadcast %6 : vector<1x128xf32> to vector<128x128xf32>
    %8 = arith.addf %5, %7 : vector<128x128xf32>
    %c0_8 = arith.constant 0 : index
    %c0_9 = arith.constant 0 : index
    %9 = vector.load %arg5[%c0_8, %c0_9] : memref<128x128xf32, #tpu.memory_space<vmem>>, vector<128x128xf32>
    tpu.vector_store %arg5[%c0_8, %c0_9], %8 {strides = array<i32>} : memref<128x128xf32, #tpu.memory_space<vmem>>, vector<128x128xf32>,
    %10 = tpu.iota {dimensions = array<i32: 0>} : vector<128x1xi32>
    %c128_i32 = arith.constant 128 : i32
    %11 = arith.muli %arg0, %c128_i32 : i32
    %12 = vector.broadcast %11 : i32 to vector<128x1xi32>
    %13 = arith.addi %10, %12 : vector<128x1xi32>
    %c300_i32 = arith.constant 300 : i32
    %14 = vector.broadcast %c300_i32 : i32 to vector<128x1xi32>
    %15 = arith.cmpi slt, %13, %14 : vector<128x1xi32>
    %16 = arith.extui %15 : vector<128x1xi1> to vector<128x1xi32>
    %17 = arith.sitofp %16 : vector<128x1xi32> to vector<128x1xf32>
    %18 = vector.broadcast %17 : vector<128x1xf32> to vector<128x128xf32>
    %19 = arith.mulf %8, %18 : vector<128x128xf32>
    %cst_10 = arith.constant dense<0.000000e+00> : vector<128xf32>
    %20 = vector.multi_reduction <add>, %19, %cst_10 [0] : vector<128x128xf32> to vector<128xf32>
    %21 = vector.shape_cast %20 : vector<128xf32> to vector<1x128xf32>
    %22 = arith.mulf %19, %19 : vector<128x128xf32>
    %cst_11 = arith.constant dense<0.000000e+00> : vector<128xf32>
    %23 = vector.multi_reduction <add>, %22, %cst_11 [0] : vector<128x128xf32> to vector<128xf32>
    %24 = vector.shape_cast %23 : vector<128xf32> to vector<1x128xf32>
    %25 = vector.shape_cast %21 : vector<1x128xf32> to vector<1x1x128xf32>
    %26 = vector.shape_cast %24 : vector<1x128xf32> to vector<1x1x128xf32>
    %27 = tpu.concatenate %25, %26 in 1 : vector<1x1x128xf32>, vector<1x1x128xf32> -> vector<1x2x128xf32>
    %c0_12 = arith.constant 0 : index
    %c0_13 = arith.constant 0 : index
    %c0_14 = arith.constant 0 : index
    %28 = vector.load %arg6[%c0_12, %c0_13, %c0_14] : memref<1x2x128xf32, #tpu.memory_space<vmem>>, vector<1x2x128xf32>
    tpu.vector_store %arg6[%c0_12, %c0_13, %c0_14], %27 {strides = array<i32>} : memref<1x2x128xf32, #tpu.memory_space<vmem>>, vector<1x2x128xf32>,
    return
  }
  func.func @transform_0(%arg0: i32) -> (i32, i32) {
    %c0_i32 = arith.constant 0 : i32
    %c0_i32_0 = arith.constant 0 : i32
    return %arg0, %c0_i32 : i32, i32
  }
  func.func @transform_1(%arg0: i32) -> (i32, i32) {
    %c0_i32 = arith.constant 0 : i32
    %c0_i32_0 = arith.constant 0 : i32
    %c0_i32_1 = arith.constant 0 : i32
    return %c0_i32, %c0_i32_0 : i32, i32
  }
  func.func @transform_2(%arg0: i32) -> (i32, i32) {
    %c0_i32 = arith.constant 0 : i32
    %c0_i32_0 = arith.constant 0 : i32
    %c0_i32_1 = arith.constant 0 : i32
    return %c0_i32, %c0_i32_0 : i32, i32
  }
  func.func @transform_3(%arg0: i32) -> (i32, i32) {
    %c0_i32 = arith.constant 0 : i32
    %c0_i32_0 = arith.constant 0 : i32
    %c0_i32_1 = arith.constant 0 : i32
    return %c0_i32, %c0_i32_0 : i32, i32
  }
  func.func @transform_4(%arg0: i32) -> (i32, i32) {
    %c0_i32 = arith.constant 0 : i32
    %c0_i32_0 = arith.constant 0 : i32
    return %arg0, %c0_i32 : i32, i32
  }
  func.func @transform_5(%arg0: i32) -> (i32, i32, i32) {
    %c0_i32 = arith.constant 0 : i32
    %c0_i32_0 = arith.constant 0 : i32
    %c0_i32_1 = arith.constant 0 : i32
    return %arg0, %c0_i32, %c0_i32_0 : i32, i32, i32
  }
}

</mosaic_0001>

<llo_original>
// kernel: tpu_custom_call.1
$region0: #{tpu_custom_call.1}
  #allocation0 [shape = 'u32[]', space=smem, size = 0x4, offset = 0x4, fixed_abs, tag = 'smem constant byte address 0x4 - core index']
  #allocation1 [shape = 'u32[144,128]{1,0:T(1,128)}', space=vmem, size = 0x12000, scoped, tag = 'internal scratch']
  %s0 = inlined_call_operand.hbm [shape: bf16[384,384], index: 0, kind: input, shape index: {}]
  %s1 = inlined_call_operand.hbm [shape: bf16[384,128], index: 1, kind: input, shape index: {}]
  %s2 = inlined_call_operand.hbm [shape: bf16[128,128], index: 2, kind: input, shape index: {}]
  %s3 = inlined_call_operand.vmem [shape: f32[1,128], index: 3, kind: input, shape index: {}]
  %s4 = inlined_call_operand.hbm [shape: f32[384,128], index: 4, kind: output, shape index: {0}]
  %s5 = inlined_call_operand.hbm [shape: f32[3,2,128], index: 5, kind: output, shape index: {1}]
  %6 = xla_tuple %s4, %s5
  %s7 = sld [smem:[#allocation0]]
  $region69: #{tpu_custom_call.1} parent=0
    _
  %s9 = ssub.s32 1, %s7
  %s10 = scalar_select 0, %s9, %s7
  $region1: #{tpu_custom_call.1} parent=0
    #allocation2 [shape = 'u8[196608]{0}', space=vmem, size = 0x30000, scoped, tag = 'input window, operand 0']
    #allocation3 [shape = 's32[2]{0}', space=sflag, size = 0x8, scoped, tag = 'scoped memory for tpu_custom_call.1']
    #allocation4 [shape = 's32[2]{0}', space=sflag, size = 0x8, scoped, tag = 'scoped memory for tpu_custom_call.1']
    #allocation5 [shape = 'u8[98304]{0}', space=vmem, size = 0x18000, scoped, tag = 'input window, operand 1, single buffered']
    #allocation6 [shape = 's32[1]{0}', space=sflag, size = 0x4, scoped, tag = 'scoped memory for tpu_custom_call.1']
    #allocation7 [shape = 'u8[32768]{0}', space=vmem, size = 0x8000, scoped, tag = 'input window, operand 2, single buffered']
    #allocation8 [shape = 'u8[131072]{0}', space=vmem, size = 0x20000, scoped, tag = 'output window, operand 0']
    #allocation9 [shape = 'u8[2048]{0}', space=vmem, size = 0x800, scoped, tag = 'output window, operand 1']
    #allocation10 [shape = 's32[2]{0}', space=sflag, size = 0x8, scoped, tag = 'scoped memory for tpu_custom_call.1']
    %11 = vsyncpa [#allocation3], 0
    %s12 = scalar_lea.sflag [#allocation3], 1
    %13 = vsyncpa %s12, 0
    %14 = vsyncpa [#allocation6], 0
    %15 = vsyncpa [#allocation4], 0
    %s16 = scalar_lea.sflag [#allocation4], 1
    %17 = vsyncpa %s16, 0
    %18 = vsyncpa [#allocation10], 0
    %s19 = scalar_lea.sflag [#allocation10], 1
    %20 = vsyncpa %s19, 0
    loop: start=0, step=1, limit=5
    $region2: #{tpu_custom_call.1} parent=1 // loop_pre_header
      _
    $region3: #{tpu_custom_call.1} parent=1 // loop_header
      %s22 = sphi 0, %s26
      %p23 = scmp.ge.s32.totalorder %s22, 5
      %s32 = sphi 0, %s34
      %s35 = sphi 0, %s32
      %s36 = sphi 0, %s35
      %s52 = sphi 0, %s36
      %s56 = sphi 0, %s56
      %s58 = sphi 0, %s56
      %s59 = sphi 0, %s58
      %s73 = sphi 0, %s59
      %s77 = sphi 0, %s77
      %s79 = sphi 0, %s77
      %s80 = sphi 0, %s79
      %s94 = sphi 0, %s80
      %s98 = sphi 0, %s98
      %s100 = sphi 0, %s98
      %s101 = sphi 0, %s100
      %s115 = sphi 0, %s101
      %s121 = sphi 0, %s123
      %s124 = sphi 0, %s121
      %s125 = sphi 0, %s124
      %s141 = sphi 0, %s125
      %s147 = sphi 0, %s149
      %s150 = sphi 0, %s147
      %s151 = sphi 0, %s150
      %s167 = sphi 0, %s151
    $region4: #{tpu_custom_call.1} parent=1 // loop_header_branch
      %25 = sbr.rel (%p23) target = $region8
    $region5: #{tpu_custom_call.1} parent=1 // loop_body
      %s27 = ssub.s32 %s22, 1
      %s28 = ssub.s32 %s22, 2
      %s29 = sadd.s32 %s22, 1
      %s30 = ssub.s32 %s22, %s29
      %p31 = scmp.eq.s32.totalorder %s30, 0
      %s33 = sadd.s32 %s32, 1
      %s34 = scalar_select %p31, %s32, %s33
      %p37 = pneg %p31
      %p38 = scmp.eq.s32.totalorder %s22, 2
      %p39 = por %p37, %p38
      %p40 = scmp.ne.s32.totalorder %s32, %s35
      %p41 = scmp.eq.s32.totalorder %s22, 0
      %p42 = por %p40, %p41
      %p43 = scmp.ne.s32.totalorder %s32, %s35
      %p44 = scmp.eq.s32.totalorder %s27, 2
      %p45 = por %p43, %p44
      %p46 = scmp.ne.s32.totalorder %s35, %s36
      %p47 = scmp.eq.s32.totalorder %s27, 0
      %p48 = por %p46, %p47
      %p49 = scmp.ne.s32.totalorder %s35, %s36
      %p50 = scmp.eq.s32.totalorder %s28, 2
      %p51 = por %p49, %p50
      %p53 = scmp.ne.s32.totalorder %s36, %s52
      %p54 = scmp.eq.s32.totalorder %s28, 0
      %p55 = por %p53, %p54
      %s57 = sadd.s32 %s56, 1
      %p60 = scmp.eq.s32.totalorder %s22, 2
      %p61 = scmp.ne.s32.totalorder %s56, %s58
      %p62 = scmp.eq.s32.totalorder %s22, 0
      %p63 = por %p61, %p62
      %p64 = scmp.ne.s32.totalorder %s56, %s58
      %p65 = scmp.eq.s32.totalorder %s27, 2
      %p66 = por %p64, %p65
      %p67 = scmp.ne.s32.totalorder %s58, %s59
      %p68 = scmp.eq.s32.totalorder %s27, 0
      %p69 = por %p67, %p68
      %p70 = scmp.ne.s32.totalorder %s58, %s59
      %p71 = scmp.eq.s32.totalorder %s28, 2
      %p72 = por %p70, %p71
      %p74 = scmp.ne.s32.totalorder %s59, %s73
      %p75 = scmp.eq.s32.totalorder %s28, 0
      %p76 = por %p74, %p75
      %s78 = sadd.s32 %s77, 1
      %p81 = scmp.eq.s32.totalorder %s22, 2
      %p82 = scmp.ne.s32.totalorder %s77, %s79
      %p83 = scmp.eq.s32.totalorder %s22, 0
      %p84 = por %p82, %p83
      %p85 = scmp.ne.s32.totalorder %s77, %s79
      %p86 = scmp.eq.s32.totalorder %s27, 2
      %p87 = por %p85, %p86
      %p88 = scmp.ne.s32.totalorder %s79, %s80
      %p89 = scmp.eq.s32.totalorder %s27, 0
      %p90 = por %p88, %p89
      %p91 = scmp.ne.s32.totalorder %s79, %s80
      %p92 = scmp.eq.s32.totalorder %s28, 2
      %p93 = por %p91, %p92
      %p95 = scmp.ne.s32.totalorder %s80, %s94
      %p96 = scmp.eq.s32.totalorder %s28, 0
      %p97 = por %p95, %p96
      %s99 = sadd.s32 %s98, 1
      %p102 = scmp.eq.s32.totalorder %s22, 2
      %p103 = scmp.ne.s32.totalorder %s98, %s100
      %p104 = scmp.eq.s32.totalorder %s22, 0
      %p105 = por %p103, %p104
      %p106 = scmp.ne.s32.totalorder %s98, %s100
      %p107 = scmp.eq.s32.totalorder %s27, 2
      %p108 = por %p106, %p107
      %p109 = scmp.ne.s32.totalorder %s100, %s101
      %p110 = scmp.eq.s32.totalorder %s27, 0
      %p111 = por %p109, %p110
      %p112 = scmp.ne.s32.totalorder %s100, %s101
      %p113 = scmp.eq.s32.totalorder %s28, 2
      %p114 = por %p112, %p113
      %p116 = scmp.ne.s32.totalorder %s101, %s115
      %p117 = scmp.eq.s32.totalorder %s28, 0
      %p118 = por %p116, %p117
      %s119 = ssub.s32 %s22, %s29
      %p120 = scmp.eq.s32.totalorder %s119, 0
      %s122 = sadd.s32 %s121, 1
      %s123 = scalar_select %p120, %s121, %s122
      %p126 = pneg %p120
      %p127 = scmp.eq.s32.totalorder %s22, 2
      %p128 = por %p126, %p127
      %p129 = scmp.ne.s32.totalorder %s121, %s124
      %p130 = scmp.eq.s32.totalorder %s22, 0
      %p131 = por %p129, %p130
      %p132 = scmp.ne.s32.totalorder %s121, %s124
      %p133 = scmp.eq.s32.totalorder %s27, 2
      %p134 = por %p132, %p133
      %p135 = scmp.ne.s32.totalorder %s124, %s125
      %p136 = scmp.eq.s32.totalorder %s27, 0
      %p137 = por %p135, %p136
      %p138 = scmp.ne.s32.totalorder %s124, %s125
      %p139 = scmp.eq.s32.totalorder %s28, 2
      %p140 = por %p138, %p139
      %p142 = scmp.ne.s32.totalorder %s125, %s141
      %p143 = scmp.eq.s32.totalorder %s28, 0
      %p144 = por %p142, %p143
      %s145 = ssub.s32 %s22, %s29
      %p146 = scmp.eq.s32.totalorder %s145, 0
      %s148 = sadd.s32 %s147, 1
      %s149 = scalar_select %p146, %s147, %s148
      %p152 = pneg %p146
      %p153 = scmp.eq.s32.totalorder %s22, 2
      %p154 = por %p152, %p153
      %p155 = scmp.ne.s32.totalorder %s147, %s150
      %p156 = scmp.eq.s32.totalorder %s22, 0
      %p157 = por %p155, %p156
      %p158 = scmp.ne.s32.totalorder %s147, %s150
      %p159 = scmp.eq.s32.totalorder %s27, 2
      %p160 = por %p158, %p159
      %p161 = scmp.ne.s32.totalorder %s150, %s151
      %p162 = scmp.eq.s32.totalorder %s27, 0
      %p163 = por %p161, %p162
      %p164 = scmp.ne.s32.totalorder %s150, %s151
      %p165 = scmp.eq.s32.totalorder %s28, 2
      %p166 = por %p164, %p165
      %p168 = scmp.ne.s32.totalorder %s151, %s167
      %p169 = scmp.eq.s32.totalorder %s28, 0
      %p170 = por %p168, %p169
      %p171 = scmp.le.s32.totalorder 1, %s22
      %p172 = scmp.lt.s32.totalorder %s22, 4
      %p173 = pnand %p171, %p172
      %p174 = pneg %p173
      // Predicated region
      $region9: #{tpu_custom_call.1} parent=5 // pred_check
        _
      $region10: #{tpu_custom_call.1} parent=5 // pred_check_branch
        %176 = sbr.rel (%p173) target = $region12
      $region11: #{tpu_custom_call.1} parent=5 // pred_region
        %s177 = ssub.s32 %s22, 1
        // Predicated region
        $region13: #{tpu_custom_call.1} parent=11 // pred_check
          %p178 = pneg %p69
        $region14: #{tpu_custom_call.1} parent=11 // pred_check_branch
          %180 = sbr.rel (%p178) target = $region16
        $region15: #{tpu_custom_call.1} parent=11 // pred_region
          %s182 = ssub.s32 3072, 3072
          %183 = vsyncadd [#allocation6], %s182
          %s184 = sshll.u32 [#allocation5], 4
          %s185 = int_to_ptr.vmem [resolvable:$true] %s184
          %190 = dma.hbm_to_vmem [thread:$0]  %s1, 3072, %s185, [#allocation6], 64, 64, 4
        $region16: #{tpu_custom_call.1} parent=11 // pred_fallthru
          _
        // Predicated region
        $region17: #{tpu_custom_call.1} parent=11 // pred_check
          %p191 = pneg %p90
        $region18: #{tpu_custom_call.1} parent=11 // pred_check_branch
          %193 = sbr.rel (%p191) target = $region20
        $region19: #{tpu_custom_call.1} parent=11 // pred_region
          %s195 = ssub.s32 1024, 1024
          %196 = vsyncadd [#allocation6], %s195
          %s197 = sshll.u32 [#allocation7], 4
          %s198 = int_to_ptr.vmem [resolvable:$true] %s197
          %203 = dma.hbm_to_vmem [thread:$0]  %s2, 1024, %s198, [#allocation6], 64, 64, 4
        $region20: #{tpu_custom_call.1} parent=11 // pred_fallthru
          _
        // Predicated region
        $region21: #{tpu_custom_call.1} parent=11 // pred_check
          %p204 = pneg %p111
        $region22: #{tpu_custom_call.1} parent=11 // pred_check_branch
          %206 = sbr.rel (%p204) target = $region24
        $region23: #{tpu_custom_call.1} parent=11 // pred_region
          _
        $region24: #{tpu_custom_call.1} parent=11 // pred_fallthru
          _
      $region12: #{tpu_custom_call.1} parent=5 // pred_fallthru
        _
      %p207 = scmp.lt.s32.totalorder %s22, 3
      // Predicated region
      $region25: #{tpu_custom_call.1} parent=5 // pred_check
        %p208 = pneg %p207
      $region26: #{tpu_custom_call.1} parent=5 // pred_check_branch
        %210 = sbr.rel (%p208) target = $region28
      $region27: #{tpu_custom_call.1} parent=5 // pred_region
        // Predicated region
        $region29: #{tpu_custom_call.1} parent=27 // pred_check
          %p211 = pneg %p42
        $region30: #{tpu_custom_call.1} parent=27 // pred_check_branch
          %213 = sbr.rel (%p211) target = $region32
        $region31: #{tpu_custom_call.1} parent=27 // pred_region
          %s214 = sand.u32 %s32, 1
          %s215 = scalar_lea.sflag [#allocation3], %s214
          %s216 = sand.u32 %s32, 1
          %s217 = smul.addr %s216, 192
          %s218 = scalar_lea.vmem [#allocation2], %s217
          %s219 = smul.u32 16, %s22
          %s221 = ssub.s32 3072, 3072
          %222 = vsyncadd %s215, %s221
          %s223 = smul.addr %s219, 3
          %s224 = smul.addr %s223, 64
          %s225 = scalar_lea.hbm %s0, %s224
          %s226 = sshll.u32 %s218, 4
          %s227 = int_to_ptr.vmem [resolvable:$true] %s226
          %232 = dma.hbm_to_vmem [thread:$0]  %s225, 3072, %s227, %s215, 192, 192, 12
        $region32: #{tpu_custom_call.1} parent=27 // pred_fallthru
          _
      $region28: #{tpu_custom_call.1} parent=5 // pred_fallthru
        _
      %p233 = scmp.le.s32.totalorder 1, %s22
      %p234 = scmp.lt.s32.totalorder %s22, 4
      %p235 = pnand %p233, %p234
      %p236 = pneg %p235
      // Predicated region
      $region33: #{tpu_custom_call.1} parent=5 // pred_check
        _
      $region34: #{tpu_custom_call.1} parent=5 // pred_check_branch
        %238 = sbr.rel (%p235) target = $region36
      $region35: #{tpu_custom_call.1} parent=5 // pred_region
        %s239 = ssub.s32 %s22, 1
        %s240 = sand.u32 %s35, 1
        %s241 = scalar_lea.sflag [#allocation3], %s240
        %s242 = sand.u32 %s35, 1
        %s243 = smul.addr %s242, 192
        %s244 = scalar_lea.vmem [#allocation2], %s243
        // Predicated region
        $region37: #{tpu_custom_call.1} parent=35 // pred_check
          %p245 = pneg %p48
        $region38: #{tpu_custom_call.1} parent=35 // pred_check_branch
          %247 = sbr.rel (%p245) target = $region40
        $region39: #{tpu_custom_call.1} parent=35 // pred_region
          %248 = dma.done %s241, 3072
        $region40: #{tpu_custom_call.1} parent=35 // pred_fallthru
          _
        // Predicated region
        $region41: #{tpu_custom_call.1} parent=35 // pred_check
          %p249 = pneg %p69
        $region42: #{tpu_custom_call.1} parent=35 // pred_check_branch
          %251 = sbr.rel (%p249) target = $region44
        $region43: #{tpu_custom_call.1} parent=35 // pred_region
          %252 = dma.done [#allocation6], 3072
        $region44: #{tpu_custom_call.1} parent=35 // pred_fallthru
          _
        // Predicated region
        $region45: #{tpu_custom_call.1} parent=35 // pred_check
          %p253 = pneg %p90
        $region46: #{tpu_custom_call.1} parent=35 // pred_check_branch
          %255 = sbr.rel (%p253) target = $region48
        $region47: #{tpu_custom_call.1} parent=35 // pred_region
          %256 = dma.done [#allocation6], 1024
        $region48: #{tpu_custom_call.1} parent=35 // pred_fallthru
          _
        %s257 = sand.u32 %s35, 1
        %s258 = scalar_lea.sflag [#allocation3], %s257
        %s259 = sand.u32 %s35, 1
        %s260 = smul.addr %s259, 192
        %s261 = scalar_lea.vmem [#allocation2], %s260
        %p262 = pneg %p48
        %p263 = pneg %p45
        %p264 = pneg %p69
        %p265 = pneg %p66
        %p266 = pneg %p90
        %p267 = pneg %p87
        %p268 = pneg %p111
        %p269 = pneg %p108
        %p270 = pneg %p137
        %p271 = pneg %p134
        %s272 = sand.u32 %s124, 1
        %s273 = scalar_lea.sflag [#allocation4], %s272
        %s274 = sand.u32 %s124, 1
        %s275 = smul.addr %s274, 128
        %s276 = scalar_lea.vmem [#allocation8], %s275
        %p277 = pneg %p163
        %p278 = pneg %p160
        %s279 = sand.u32 %s150, 1
        %s280 = scalar_lea.sflag [#allocation10], %s279
        %s281 = sand.u32 %s150, 1
        %s282 = smul.addr %s281, 2
        %s283 = scalar_lea.vmem [#allocation9], %s282
        %s284 = smul.u32 16, %s27
        %s285 = smul.u32 16, %s27
        %v287 = vld [vmem:[%s244] sm:$0xff]
        %v288 = vld [vmem:[%s244 + $0x8] sm:$0xf]
        %v289 = vld [vmem:[%s244 + $0xc] sm:$0xff]
        %v290 = vld [vmem:[%s244 + $0x14] sm:$0xf]
        %v291 = vld [vmem:[%s244 + $0x18] sm:$0xff]
        %v292 = vld [vmem:[%s244 + $0x20] sm:$0xf]
        %v293 = vld [vmem:[%s244 + $0x24] sm:$0xff]
        %v294 = vld [vmem:[%s244 + $0x2c] sm:$0xf]
        %v295 = vld [vmem:[%s244 + $0x30] sm:$0xff]
        %v296 = vld [vmem:[%s244 + $0x38] sm:$0xf]
        %v297 = vld [vmem:[%s244 + $0x3c] sm:$0xff]
        %v298 = vld [vmem:[%s244 + $0x44] sm:$0xf]
        %v299 = vld [vmem:[%s244 + $0x48] sm:$0xff]
        %v300 = vld [vmem:[%s244 + $0x50] sm:$0xf]
        %v301 = vld [vmem:[%s244 + $0x54] sm:$0xff]
        %v302 = vld [vmem:[%s244 + $0x5c] sm:$0xf]
        %v303 = vld [vmem:[%s244 + $0x60] sm:$0xff]
        %v304 = vld [vmem:[%s244 + $0x68] sm:$0xf]
        %v305 = vld [vmem:[%s244 + $0x6c] sm:$0xff]
        %v306 = vld [vmem:[%s244 + $0x74] sm:$0xf]
        %v307 = vld [vmem:[%s244 + $0x78] sm:$0xff]
        %v308 = vld [vmem:[%s244 + $0x80] sm:$0xf]
        %v309 = vld [vmem:[%s244 + $0x84] sm:$0xff]
        %v310 = vld [vmem:[%s244 + $0x8c] sm:$0xf]
        %v311 = vld [vmem:[%s244 + $0x90] sm:$0xff]
        %v312 = vld [vmem:[%s244 + $0x98] sm:$0xf]
        %v313 = vld [vmem:[%s244 + $0x9c] sm:$0xff]
        %v314 = vld [vmem:[%s244 + $0xa4] sm:$0xf]
        %v315 = vld [vmem:[%s244 + $0xa8] sm:$0xff]
        %v316 = vld [vmem:[%s244 + $0xb0] sm:$0xf]
        %v317 = vld [vmem:[%s244 + $0xb4] sm:$0xff]
        %v318 = vld [vmem:[%s244 + $0xbc] sm:$0xf]
        %v319 = vld [vmem:[#allocation5] sm:$0xf]
        %v320 = vld [vmem:[#allocation5 + $0x4] sm:$0xf]
        %v321 = vld [vmem:[#allocation5 + $0x8] sm:$0xf]
        %v322 = vld [vmem:[#allocation5 + $0xc] sm:$0xf]
        %v323 = vld [vmem:[#allocation5 + $0x10] sm:$0xf]
        %v324 = vld [vmem:[#allocation5 + $0x14] sm:$0xf]
        %v325 = vld [vmem:[#allocation5 + $0x18] sm:$0xf]
        %v326 = vld [vmem:[#allocation5 + $0x1c] sm:$0xf]
        %v327 = vld [vmem:[#allocation5 + $0x20] sm:$0xf]
        %v328 = vld [vmem:[#allocation5 + $0x24] sm:$0xf]
        %v329 = vld [vmem:[#allocation5 + $0x28] sm:$0xf]
        %v330 = vld [vmem:[#allocation5 + $0x2c] sm:$0xf]
        %v331 = vld [vmem:[#allocation5 + $0x30] sm:$0xf]
        %v332 = vld [vmem:[#allocation5 + $0x34] sm:$0xf]
        %v333 = vld [vmem:[#allocation5 + $0x38] sm:$0xf]
        %v334 = vld [vmem:[#allocation5 + $0x3c] sm:$0xf]
        %v335 = vld [vmem:[#allocation5 + $0x40] sm:$0xf]
        %v336 = vld [vmem:[#allocation5 + $0x44] sm:$0xf]
        %v337 = vld [vmem:[#allocation5 + $0x48] sm:$0xf]
        %v338 = vld [vmem:[#allocation5 + $0x4c] sm:$0xf]
        %v339 = vld [vmem:[#allocation5 + $0x50] sm:$0xf]
        %v340 = vld [vmem:[#allocation5 + $0x54] sm:$0xf]
        %v341 = vld [vmem:[#allocation5 + $0x58] sm:$0xf]
        %v342 = vld [vmem:[#allocation5 + $0x5c] sm:$0xf]
        %v343 = vld [vmem:[#allocation5 + $0x60] sm:$0xf]
        %v344 = vld [vmem:[#allocation5 + $0x64] sm:$0xf]
        %v345 = vld [vmem:[#allocation5 + $0x68] sm:$0xf]
        %v346 = vld [vmem:[#allocation5 + $0x6c] sm:$0xf]
        %v347 = vld [vmem:[#allocation5 + $0x70] sm:$0xf]
        %v348 = vld [vmem:[#allocation5 + $0x74] sm:$0xf]
        %v349 = vld [vmem:[#allocation5 + $0x78] sm:$0xf]
        %v350 = vld [vmem:[#allocation5 + $0x7c] sm:$0xf]
        %v351 = vld [vmem:[#allocation5 + $0x80] sm:$0xf]
        %v352 = vld [vmem:[#allocation5 + $0x84] sm:$0xf]
        %v353 = vld [vmem:[#allocation5 + $0x88] sm:$0xf]
        %v354 = vld [vmem:[#allocation5 + $0x8c] sm:$0xf]
        %v355 = vld [vmem:[#allocation5 + $0x90] sm:$0xf]
        %v356 = vld [vmem:[#allocation5 + $0x94] sm:$0xf]
        %v357 = vld [vmem:[#allocation5 + $0x98] sm:$0xf]
        %v358 = vld [vmem:[#allocation5 + $0x9c] sm:$0xf]
        %v359 = vld [vmem:[#allocation5 + $0xa0] sm:$0xf]
        %v360 = vld [vmem:[#allocation5 + $0xa4] sm:$0xf]
        %v361 = vld [vmem:[#allocation5 + $0xa8] sm:$0xf]
        %v362 = vld [vmem:[#allocation5 + $0xac] sm:$0xf]
        %v363 = vld [vmem:[#allocation5 + $0xb0] sm:$0xf]
        %v364 = vld [vmem:[#allocation5 + $0xb4] sm:$0xf]
        %v365 = vld [vmem:[#allocation5 + $0xb8] sm:$0xf]
        %v366 = vld [vmem:[#allocation5 + $0xbc] sm:$0xf]
        %v399 = vunpack.c.l.b16 %v287
        %v400 = vunpack.c.h.b16 %v287
        %v401 = vunpack.c.l.b16 %v288
        %v402 = vunpack.c.l.b16 %v289
        %v403 = vunpack.c.h.b16 %v289
        %v404 = vunpack.c.l.b16 %v290
        %v405 = vunpack.c.l.b16 %v291
        %v406 = vunpack.c.h.b16 %v291
        %v407 = vunpack.c.l.b16 %v292
        %v408 = vunpack.c.l.b16 %v293
        %v409 = vunpack.c.h.b16 %v293
        %v410 = vunpack.c.l.b16 %v294
        %v411 = vunpack.c.l.b16 %v295
        %v412 = vunpack.c.h.b16 %v295
        %v413 = vunpack.c.l.b16 %v296
        %v414 = vunpack.c.l.b16 %v297
        %v415 = vunpack.c.h.b16 %v297
        %v416 = vunpack.c.l.b16 %v298
        %v417 = vunpack.c.l.b16 %v299
        %v418 = vunpack.c.h.b16 %v299
        %v419 = vunpack.c.l.b16 %v300
        %v420 = vunpack.c.l.b16 %v301
        %v421 = vunpack.c.h.b16 %v301
        %v422 = vunpack.c.l.b16 %v302
        %v423 = vunpack.c.l.b16 %v303
        %v424 = vunpack.c.h.b16 %v303
        %v425 = vunpack.c.l.b16 %v304
        %v426 = vunpack.c.l.b16 %v305
        %v427 = vunpack.c.h.b16 %v305
        %v428 = vunpack.c.l.b16 %v306
        %v429 = vunpack.c.l.b16 %v307
        %v430 = vunpack.c.h.b16 %v307
        %v431 = vunpack.c.l.b16 %v308
        %v432 = vunpack.c.l.b16 %v309
        %v433 = vunpack.c.h.b16 %v309
        %v434 = vunpack.c.l.b16 %v310
        %v435 = vunpack.c.l.b16 %v311
        %v436 = vunpack.c.h.b16 %v311
        %v437 = vunpack.c.l.b16 %v312
        %v438 = vunpack.c.l.b16 %v313
        %v439 = vunpack.c.h.b16 %v313
        %v440 = vunpack.c.l.b16 %v314
        %v441 = vunpack.c.l.b16 %v315
        %v442 = vunpack.c.h.b16 %v315
        %v443 = vunpack.c.l.b16 %v316
        %v444 = vunpack.c.l.b16 %v317
        %v445 = vunpack.c.h.b16 %v317
        %v446 = vunpack.c.l.b16 %v318
        %v447 = vpack.c.b16 %v402, %v399
        %v448 = vpack.c.b16 %v403, %v400
        %v449 = vpack.c.b16 %v404, %v401
        %v450 = vpack.c.b16 %v408, %v405
        %v451 = vpack.c.b16 %v409, %v406
        %v452 = vpack.c.b16 %v410, %v407
        %v453 = vpack.c.b16 %v414, %v411
        %v454 = vpack.c.b16 %v415, %v412
        %v455 = vpack.c.b16 %v416, %v413
        %v456 = vpack.c.b16 %v420, %v417
        %v457 = vpack.c.b16 %v421, %v418
        %v458 = vpack.c.b16 %v422, %v419
        %v459 = vpack.c.b16 %v426, %v423
        %v460 = vpack.c.b16 %v427, %v424
        %v461 = vpack.c.b16 %v428, %v425
        %v462 = vpack.c.b16 %v432, %v429
        %v463 = vpack.c.b16 %v433, %v430
        %v464 = vpack.c.b16 %v434, %v431
        %v465 = vpack.c.b16 %v438, %v435
        %v466 = vpack.c.b16 %v439, %v436
        %v467 = vpack.c.b16 %v440, %v437
        %v468 = vpack.c.b16 %v444, %v441
        %v469 = vpack.c.b16 %v445, %v442
        %v470 = vpack.c.b16 %v446, %v443
        %v543 = vunpack.c.l.b16 %v319
        %v544 = vunpack.c.l.b16 %v320
        %v545 = vunpack.c.l.b16 %v321
        %v546 = vunpack.c.l.b16 %v322
        %v547 = vunpack.c.l.b16 %v323
        %v548 = vunpack.c.l.b16 %v324
        %v549 = vunpack.c.l.b16 %v325
        %v550 = vunpack.c.l.b16 %v326
        %v551 = vunpack.c.l.b16 %v327
        %v552 = vunpack.c.l.b16 %v328
        %v553 = vunpack.c.l.b16 %v329
        %v554 = vunpack.c.l.b16 %v330
        %v555 = vunpack.c.l.b16 %v331
        %v556 = vunpack.c.l.b16 %v332
        %v557 = vunpack.c.l.b16 %v333
        %v558 = vunpack.c.l.b16 %v334
        %v559 = vunpack.c.l.b16 %v335
        %v560 = vunpack.c.l.b16 %v336
        %v561 = vunpack.c.l.b16 %v337
        %v562 = vunpack.c.l.b16 %v338
        %v563 = vunpack.c.l.b16 %v339
        %v564 = vunpack.c.l.b16 %v340
        %v565 = vunpack.c.l.b16 %v341
        %v566 = vunpack.c.l.b16 %v342
        %v567 = vunpack.c.l.b16 %v343
        %v568 = vunpack.c.l.b16 %v344
        %v569 = vunpack.c.l.b16 %v345
        %v570 = vunpack.c.l.b16 %v346
        %v571 = vunpack.c.l.b16 %v347
        %v572 = vunpack.c.l.b16 %v348
        %v573 = vunpack.c.l.b16 %v349
        %v574 = vunpack.c.l.b16 %v350
        %v575 = vunpack.c.l.b16 %v351
        %v576 = vunpack.c.l.b16 %v352
        %v577 = vunpack.c.l.b16 %v353
        %v578 = vunpack.c.l.b16 %v354
        %v579 = vunpack.c.l.b16 %v355
        %v580 = vunpack.c.l.b16 %v356
        %v581 = vunpack.c.l.b16 %v357
        %v582 = vunpack.c.l.b16 %v358
        %v583 = vunpack.c.l.b16 %v359
        %v584 = vunpack.c.l.b16 %v360
        %v585 = vunpack.c.l.b16 %v361
        %v586 = vunpack.c.l.b16 %v362
        %v587 = vunpack.c.l.b16 %v363
        %v588 = vunpack.c.l.b16 %v364
        %v589 = vunpack.c.l.b16 %v365
        %v590 = vunpack.c.l.b16 %v366
        %v591 = vpack.c.b16 %v544, %v543
        %v592 = vpack.c.b16 %v546, %v545
        %v593 = vpack.c.b16 %v548, %v547
        %v594 = vpack.c.b16 %v550, %v549
        %v595 = vpack.c.b16 %v552, %v551
        %v596 = vpack.c.b16 %v554, %v553
        %v597 = vpack.c.b16 %v556, %v555
        %v598 = vpack.c.b16 %v558, %v557
        %v599 = vpack.c.b16 %v560, %v559
        %v600 = vpack.c.b16 %v562, %v561
        %v601 = vpack.c.b16 %v564, %v563
        %v602 = vpack.c.b16 %v566, %v565
        %v603 = vpack.c.b16 %v568, %v567
        %v604 = vpack.c.b16 %v570, %v569
        %v605 = vpack.c.b16 %v572, %v571
        %v606 = vpack.c.b16 %v574, %v573
        %v607 = vpack.c.b16 %v576, %v575
        %v608 = vpack.c.b16 %v578, %v577
        %v609 = vpack.c.b16 %v580, %v579
        %v610 = vpack.c.b16 %v582, %v581
        %v611 = vpack.c.b16 %v584, %v583
        %v612 = vpack.c.b16 %v586, %v585
        %v613 = vpack.c.b16 %v588, %v587
        %v614 = vpack.c.b16 %v590, %v589
        %639 = vmatprep.subr.bf16.mxu0 0
        %640 = vmatpush1.bf16.msra.mxu0 %v591
        %641 = vmatprep.subr.bf16.mxu0 0
        %642 = vmatpush1.bf16.msra.mxu0 %v592
        %643 = vmatprep.subr.bf16.mxu0 0
        %644 = vmatpush1.bf16.msra.mxu0 %v593
        %645 = vmatprep.subr.bf16.mxu0 0
        %646 = vmatpush1.bf16.msra.mxu0 %v594
        %647 = vmatprep.subr.bf16.mxu0 0
        %648 = vmatpush1.bf16.msra.mxu0 %v595
        %649 = vmatprep.subr.bf16.mxu0 0
        %650 = vmatpush1.bf16.msra.mxu0 %v596
        %651 = vmatprep.subr.bf16.mxu0 0
        %652 = vmatpush1.bf16.msra.mxu0 %v597
        %653 = vmatprep.subr.bf16.mxu0 0
        %654 = vmatpush1.bf16.msra.mxu0 %v598
        %655 = vmatprep.subr.bf16.mxu0 0
        %656 = vmatpush1.bf16.msra.mxu0 %v599
        %657 = vmatprep.subr.bf16.mxu0 0
        %658 = vmatpush1.bf16.msra.mxu0 %v600
        %659 = vmatprep.subr.bf16.mxu0 0
        %660 = vmatpush1.bf16.msra.mxu0 %v601
        %661 = vmatprep.subr.bf16.mxu0 0
        %662 = vmatpush1.bf16.msra.mxu0 %v602
        %663 = vmatprep.subr.bf16.mxu0 0
        %664 = vmatpush1.bf16.msra.mxu0 %v603
        %665 = vmatprep.subr.bf16.mxu0 0
        %666 = vmatpush1.bf16.msra.mxu0 %v604
        %667 = vmatprep.subr.bf16.mxu0 0
        %668 = vmatpush1.bf16.msra.mxu0 %v605
        %669 = vmatprep.subr.bf16.mxu0 0
        %670 = vmatpush1.bf16.msra.mxu0 %v606
        %671 = vmatprep.mubr.bf16.mxu0 %v448
        %672 = vmatmul.mubr.bf16.gmra.mrb[0].mxu0 %v447
        %v673 = vpop.f32.mrb[0].mxu0
        %v674 = vadd.f32 0.0, %v673
        %v675 = vpop.f32.mrb[0].mxu0
        %v676 = vpop.f32.mrb[0].mxu0
        %v677 = vadd.f32 0.0, %v676
        %v678 = vpop.f32.mrb[0].mxu0
        %679 = vmatprep.mubr.bf16.mxu0 %v451
        %680 = vmatmul.mubr.bf16.gmra.mrb[0].mxu0 %v450
        %v681 = vpop.f32.mrb[0].mxu0
        %v682 = vadd.f32 0.0, %v681
        %v683 = vpop.f32.mrb[0].mxu0
        %v684 = vpop.f32.mrb[0].mxu0
        %v685 = vadd.f32 0.0, %v684
        %v686 = vpop.f32.mrb[0].mxu0
        %687 = vmatprep.mubr.bf16.mxu0 %v454
        %688 = vmatmul.mubr.bf16.gmra.mrb[0].mxu0 %v453
        %v689 = vpop.f32.mrb[0].mxu0
        %v690 = vadd.f32 0.0, %v689
        %v691 = vpop.f32.mrb[0].mxu0
        %v692 = vpop.f32.mrb[0].mxu0
        %v693 = vadd.f32 0.0, %v692
        %v694 = vpop.f32.mrb[0].mxu0
        %695 = vmatprep.mubr.bf16.mxu0 %v457
        %696 = vmatmul.mubr.bf16.gmra.mrb[0].mxu0 %v456
        %v697 = vpop.f32.mrb[0].mxu0
        %v698 = vadd.f32 0.0, %v697
        %v699 = vpop.f32.mrb[0].mxu0
        %v700 = vpop.f32.mrb[0].mxu0
        %v701 = vadd.f32 0.0, %v700
        %v702 = vpop.f32.mrb[0].mxu0
        %703 = vmatprep.mubr.bf16.mxu0 %v460
        %704 = vmatmul.mubr.bf16.gmra.mrb[0].mxu0 %v459
        %v705 = vpop.f32.mrb[0].mxu0
        %v706 = vadd.f32 0.0, %v705
        %v707 = vpop.f32.mrb[0].mxu0
        %v708 = vpop.f32.mrb[0].mxu0
        %v709 = vadd.f32 0.0, %v708
        %v710 = vpop.f32.mrb[0].mxu0
        %711 = vmatprep.mubr.bf16.mxu0 %v463
        %712 = vmatmul.mubr.bf16.gmra.mrb[0].mxu0 %v462
        %v713 = vpop.f32.mrb[0].mxu0
        %v714 = vadd.f32 0.0, %v713
        %v715 = vpop.f32.mrb[0].mxu0
        %v716 = vpop.f32.mrb[0].mxu0
        %v717 = vadd.f32 0.0, %v716
        %v718 = vpop.f32.mrb[0].mxu0
        %719 = vmatprep.mubr.bf16.mxu0 %v466
        %720 = vmatmul.mubr.bf16.gmra.mrb[0].mxu0 %v465
        %v721 = vpop.f32.mrb[0].mxu0
        %v722 = vadd.f32 0.0, %v721
        %v723 = vpop.f32.mrb[0].mxu0
        %v724 = vpop.f32.mrb[0].mxu0
        %v725 = vadd.f32 0.0, %v724
        %v726 = vpop.f32.mrb[0].mxu0
        %727 = vmatprep.mubr.bf16.mxu0 %v469
        %728 = vmatmul.mubr.bf16.gmra.mrb[0].mxu0 %v468
        %v729 = vpop.f32.mrb[0].mxu0
        %v730 = vadd.f32 0.0, %v729
        %v731 = vpop.f32.mrb[0].mxu0
        %v732 = vpop.f32.mrb[0].mxu0
        %v733 = vadd.f32 0.0, %v732
        %v734 = vpop.f32.mrb[0].mxu0
        %735 = vdwg.mxu0
        %736 = vmatprep.subr.bf16.mxu0 0
        %737 = vmatpush1.bf16.msra.mxu0 %v607
        %738 = vmatprep.subr.bf16.mxu0 0
        %739 = vmatpush1.bf16.msra.mxu0 %v608
        %740 = vmatprep.subr.bf16.mxu0 0
        %741 = vmatpush1.bf16.msra.mxu0 %v609
        %742 = vmatprep.subr.bf16.mxu0 0
        %743 = vmatpush1.bf16.msra.mxu0 %v610
        %744 = vmatprep.subr.bf16.mxu0 0
        %745 = vmatpush1.bf16.msra.mxu0 %v611
        %746 = vmatprep.subr.bf16.mxu0 0
        %747 = vmatpush1.bf16.msra.mxu0 %v612
        %748 = vmatprep.subr.bf16.mxu0 0
        %749 = vmatpush1.bf16.msra.mxu0 %v613
        %750 = vmatprep.subr.bf16.mxu0 0
        %751 = vmatpush1.bf16.msra.mxu0 %v614
        %752 = vmatprep.subr.bf16.mxu0 0
        %753 = vmatpush1.bf16.msra.mxu0 0
        %754 = vmatprep.subr.bf16.mxu0 0
        %755 = vmatpush1.bf16.msra.mxu0 0
        %756 = vmatprep.subr.bf16.mxu0 0
        %757 = vmatpush1.bf16.msra.mxu0 0
        %758 = vmatprep.subr.bf16.mxu0 0
        %759 = vmatpush1.bf16.msra.mxu0 0
        %760 = vmatprep.subr.bf16.mxu0 0
        %761 = vmatpush1.bf16.msra.mxu0 0
        %762 = vmatprep.subr.bf16.mxu0 0
        %763 = vmatpush1.bf16.msra.mxu0 0
        %764 = vmatprep.subr.bf16.mxu0 0
        %765 = vmatpush1.bf16.msra.mxu0 0
        %766 = vmatprep.subr.bf16.mxu0 0
        %767 = vmatpush1.bf16.msra.mxu0 0
        %768 = vmatprep.mubr.bf16.mxu0 0
        %769 = vmatmul.mubr.bf16.gmra.mrb[0].mxu0 %v449
        %v770 = vpop.f32.mrb[0].mxu0
        %v771 = vadd.f32 %v674, %v770
        %v772 = vpop.f32.mrb[0].mxu0
        %v773 = vpop.f32.mrb[0].mxu0
        %v774 = vadd.f32 %v677, %v773
        %v775 = vpop.f32.mrb[0].mxu0
        %776 = vmatprep.mubr.bf16.mxu0 0
        %777 = vmatmul.mubr.bf16.gmra.mrb[0].mxu0 %v452
        %v778 = vpop.f32.mrb[0].mxu0
        %v779 = vadd.f32 %v682, %v778
        %v780 = vpop.f32.mrb[0].mxu0
        %v781 = vpop.f32.mrb[0].mxu0
        %v782 = vadd.f32 %v685, %v781
        %v783 = vpop.f32.mrb[0].mxu0
        %784 = vmatprep.mubr.bf16.mxu0 0
        %785 = vmatmul.mubr.bf16.gmra.mrb[0].mxu0 %v455
        %v786 = vpop.f32.mrb[0].mxu0
        %v787 = vadd.f32 %v690, %v786
        %v788 = vpop.f32.mrb[0].mxu0
        %v789 = vpop.f32.mrb[0].mxu0
        %v790 = vadd.f32 %v693, %v789
        %v791 = vpop.f32.mrb[0].mxu0
        %792 = vmatprep.mubr.bf16.mxu0 0
        %793 = vmatmul.mubr.bf16.gmra.mrb[0].mxu0 %v458
        %v794 = vpop.f32.mrb[0].mxu0
        %v795 = vadd.f32 %v698, %v794
        %v796 = vpop.f32.mrb[0].mxu0
        %v797 = vpop.f32.mrb[0].mxu0
        %v798 = vadd.f32 %v701, %v797
        %v799 = vpop.f32.mrb[0].mxu0
        %800 = vmatprep.mubr.bf16.mxu0 0
        %801 = vmatmul.mubr.bf16.gmra.mrb[0].mxu0 %v461
        %v802 = vpop.f32.mrb[0].mxu0
        %v803 = vadd.f32 %v706, %v802
        %v804 = vpop.f32.mrb[0].mxu0
        %v805 = vpop.f32.mrb[0].mxu0
        %v806 = vadd.f32 %v709, %v805
        %v807 = vpop.f32.mrb[0].mxu0
        %808 = vmatprep.mubr.bf16.mxu0 0
        %809 = vmatmul.mubr.bf16.gmra.mrb[0].mxu0 %v464
        %v810 = vpop.f32.mrb[0].mxu0
        %v811 = vadd.f32 %v714, %v810
        %v812 = vpop.f32.mrb[0].mxu0
        %v813 = vpop.f32.mrb[0].mxu0
        %v814 = vadd.f32 %v717, %v813
        %v815 = vpop.f32.mrb[0].mxu0
        %816 = vmatprep.mubr.bf16.mxu0 0
        %817 = vmatmul.mubr.bf16.gmra.mrb[0].mxu0 %v467
        %v818 = vpop.f32.mrb[0].mxu0
        %v819 = vadd.f32 %v722, %v818
        %v820 = vpop.f32.mrb[0].mxu0
        %v821 = vpop.f32.mrb[0].mxu0
        %v822 = vadd.f32 %v725, %v821
        %v823 = vpop.f32.mrb[0].mxu0
        %824 = vmatprep.mubr.bf16.mxu0 0
        %825 = vmatmul.mubr.bf16.gmra.mrb[0].mxu0 %v470
        %v826 = vpop.f32.mrb[0].mxu0
        %v827 = vadd.f32 %v730, %v826
        %v828 = vpop.f32.mrb[0].mxu0
        %v829 = vpop.f32.mrb[0].mxu0
        %v830 = vadd.f32 %v733, %v829
        %v831 = vpop.f32.mrb[0].mxu0
        %832 = vdwg.mxu0
        %v833 = vpack.c.bf16 %v774, %v771
        %v834 = vpack.c.bf16 %v782, %v779
        %v835 = vpack.c.bf16 %v790, %v787
        %v836 = vpack.c.bf16 %v798, %v795
        %v837 = vpack.c.bf16 %v806, %v803
        %v838 = vpack.c.bf16 %v814, %v811
        %v839 = vpack.c.bf16 %v822, %v819
        %v840 = vpack.c.bf16 %v830, %v827
        %v841 = vld [vmem:[#allocation7] sm:$0xf]
        %v842 = vld [vmem:[#allocation7 + $0x4] sm:$0xf]
        %v843 = vld [vmem:[#allocation7 + $0x8] sm:$0xf]
        %v844 = vld [vmem:[#allocation7 + $0xc] sm:$0xf]
        %v845 = vld [vmem:[#allocation7 + $0x10] sm:$0xf]
        %v846 = vld [vmem:[#allocation7 + $0x14] sm:$0xf]
        %v847 = vld [vmem:[#allocation7 + $0x18] sm:$0xf]
        %v848 = vld [vmem:[#allocation7 + $0x1c] sm:$0xf]
        %v849 = vld [vmem:[#allocation7 + $0x20] sm:$0xf]
        %v850 = vld [vmem:[#allocation7 + $0x24] sm:$0xf]
        %v851 = vld [vmem:[#allocation7 + $0x28] sm:$0xf]
        %v852 = vld [vmem:[#allocation7 + $0x2c] sm:$0xf]
        %v853 = vld [vmem:[#allocation7 + $0x30] sm:$0xf]
        %v854 = vld [vmem:[#allocation7 + $0x34] sm:$0xf]
        %v855 = vld [vmem:[#allocation7 + $0x38] sm:$0xf]
        %v856 = vld [vmem:[#allocation7 + $0x3c] sm:$0xf]
        %v857 = vld [vmem:[%s3] sm:$0x1]
        %v859 = vlaneseq
        %v860 = vshrl.u32 %v859, 7
        %v861 = vsub.s32 0, %v860
        %v862 = vrot.slane %v857, %v861
        %v880 = vunpack.c.l.b16 %v841
        %v881 = vunpack.c.l.b16 %v842
        %v882 = vunpack.c.l.b16 %v843
        %v883 = vunpack.c.l.b16 %v844
        %v884 = vunpack.c.l.b16 %v845
        %v885 = vunpack.c.l.b16 %v846
        %v886 = vunpack.c.l.b16 %v847
        %v887 = vunpack.c.l.b16 %v848
        %v888 = vunpack.c.l.b16 %v849
        %v889 = vunpack.c.l.b16 %v850
        %v890 = vunpack.c.l.b16 %v851
        %v891 = vunpack.c.l.b16 %v852
        %v892 = vunpack.c.l.b16 %v853
        %v893 = vunpack.c.l.b16 %v854
        %v894 = vunpack.c.l.b16 %v855
        %v895 = vunpack.c.l.b16 %v856
        %v896 = vpack.c.b16 %v881, %v880
        %v897 = vpack.c.b16 %v883, %v882
        %v898 = vpack.c.b16 %v885, %v884
        %v899 = vpack.c.b16 %v887, %v886
        %v900 = vpack.c.b16 %v889, %v888
        %v901 = vpack.c.b16 %v891, %v890
        %v902 = vpack.c.b16 %v893, %v892
        %v903 = vpack.c.b16 %v895, %v894
        %912 = vmatprep.subr.bf16.mxu0 0
        %913 = vmatpush1.bf16.msra.mxu0 %v896
        %914 = vmatprep.subr.bf16.mxu0 0
        %915 = vmatpush1.bf16.msra.mxu0 %v897
        %916 = vmatprep.subr.bf16.mxu0 0
        %917 = vmatpush1.bf16.msra.mxu0 %v898
        %918 = vmatprep.subr.bf16.mxu0 0
        %919 = vmatpush1.bf16.msra.mxu0 %v899
        %920 = vmatprep.subr.bf16.mxu0 0
        %921 = vmatpush1.bf16.msra.mxu0 %v900
        %922 = vmatprep.subr.bf16.mxu0 0
        %923 = vmatpush1.bf16.msra.mxu0 %v901
        %924 = vmatprep.subr.bf16.mxu0 0
        %925 = vmatpush1.bf16.msra.mxu0 %v902
        %926 = vmatprep.subr.bf16.mxu0 0
        %927 = vmatpush1.bf16.msra.mxu0 %v903
        %928 = vmatprep.subr.bf16.mxu0 0
        %929 = vmatpush1.bf16.msra.mxu0 0
        %930 = vmatprep.subr.bf16.mxu0 0
        %931 = vmatpush1.bf16.msra.mxu0 0
        %932 = vmatprep.subr.bf16.mxu0 0
        %933 = vmatpush1.bf16.msra.mxu0 0
        %934 = vmatprep.subr.bf16.mxu0 0
        %935 = vmatpush1.bf16.msra.mxu0 0
        %936 = vmatprep.subr.bf16.mxu0 0
        %937 = vmatpush1.bf16.msra.mxu0 0
        %938 = vmatprep.subr.bf16.mxu0 0
        %939 = vmatpush1.bf16.msra.mxu0 0
        %940 = vmatprep.subr.bf16.mxu0 0
        %941 = vmatpush1.bf16.msra.mxu0 0
        %942 = vmatprep.subr.bf16.mxu0 0
        %943 = vmatpush1.bf16.msra.mxu0 0
        %944 = vmatprep.mubr.bf16.mxu0 0
        %945 = vmatmul.mubr.bf16.gmra.mrb[0].mxu0 %v833
        %v946 = vpop.f32.mrb[0].mxu0
        %v947 = vadd.f32 %v862, %v946
        %v948 = vpop.f32.mrb[0].mxu0
        %v949 = vpop.f32.mrb[0].mxu0
        %v950 = vadd.f32 %v862, %v949
        %v951 = vpop.f32.mrb[0].mxu0
        %952 = vmatprep.mubr.bf16.mxu0 0
        %953 = vmatmul.mubr.bf16.gmra.mrb[0].mxu0 %v834
        %v954 = vpop.f32.mrb[0].mxu0
        %v955 = vadd.f32 %v862, %v954
        %v956 = vpop.f32.mrb[0].mxu0
        %v957 = vpop.f32.mrb[0].mxu0
        %v958 = vadd.f32 %v862, %v957
        %v959 = vpop.f32.mrb[0].mxu0
        %960 = vmatprep.mubr.bf16.mxu0 0
        %961 = vmatmul.mubr.bf16.gmra.mrb[0].mxu0 %v835
        %v962 = vpop.f32.mrb[0].mxu0
        %v963 = vadd.f32 %v862, %v962
        %v964 = vpop.f32.mrb[0].mxu0
        %v965 = vpop.f32.mrb[0].mxu0
        %v966 = vadd.f32 %v862, %v965
        %v967 = vpop.f32.mrb[0].mxu0
        %968 = vmatprep.mubr.bf16.mxu0 0
        %969 = vmatmul.mubr.bf16.gmra.mrb[0].mxu0 %v836
        %v970 = vpop.f32.mrb[0].mxu0
        %v971 = vadd.f32 %v862, %v970
        %v972 = vpop.f32.mrb[0].mxu0
        %v973 = vpop.f32.mrb[0].mxu0
        %v974 = vadd.f32 %v862, %v973
        %v975 = vpop.f32.mrb[0].mxu0
        %976 = vmatprep.mubr.bf16.mxu0 0
        %977 = vmatmul.mubr.bf16.gmra.mrb[0].mxu0 %v837
        %v978 = vpop.f32.mrb[0].mxu0
        %v979 = vadd.f32 %v862, %v978
        %v980 = vpop.f32.mrb[0].mxu0
        %v981 = vpop.f32.mrb[0].mxu0
        %v982 = vadd.f32 %v862, %v981
        %v983 = vpop.f32.mrb[0].mxu0
        %984 = vmatprep.mubr.bf16.mxu0 0
        %985 = vmatmul.mubr.bf16.gmra.mrb[0].mxu0 %v838
        %v986 = vpop.f32.mrb[0].mxu0
        %v987 = vadd.f32 %v862, %v986
        %v988 = vpop.f32.mrb[0].mxu0
        %v989 = vpop.f32.mrb[0].mxu0
        %v990 = vadd.f32 %v862, %v989
        %v991 = vpop.f32.mrb[0].mxu0
        %992 = vmatprep.mubr.bf16.mxu0 0
        %993 = vmatmul.mubr.bf16.gmra.mrb[0].mxu0 %v839
        %v994 = vpop.f32.mrb[0].mxu0
        %v995 = vadd.f32 %v862, %v994
        %v996 = vpop.f32.mrb[0].mxu0
        %v997 = vpop.f32.mrb[0].mxu0
        %v998 = vadd.f32 %v862, %v997
        %v999 = vpop.f32.mrb[0].mxu0
        %1000 = vmatprep.mubr.bf16.mxu0 0
        %1001 = vmatmul.mubr.bf16.gmra.mrb[0].mxu0 %v840
        %v1002 = vpop.f32.mrb[0].mxu0
        %v1003 = vadd.f32 %v862, %v1002
        %v1004 = vpop.f32.mrb[0].mxu0
        %v1005 = vpop.f32.mrb[0].mxu0
        %v1006 = vadd.f32 %v862, %v1005
        %v1007 = vpop.f32.mrb[0].mxu0
        %1008 = vdwg.mxu0
        %1009 = vst [vmem:[%s276] sm:$0xff] %v947
        %1010 = vst [vmem:[%s276 + $0x8] sm:$0xff] %v950
        %1011 = vst [vmem:[%s276 + $0x10] sm:$0xff] %v955
        %1012 = vst [vmem:[%s276 + $0x18] sm:$0xff] %v958
        %1013 = vst [vmem:[%s276 + $0x20] sm:$0xff] %v963
        %1014 = vst [vmem:[%s276 + $0x28] sm:$0xff] %v966
        %1015 = vst [vmem:[%s276 + $0x30] sm:$0xff] %v971
        %1016 = vst [vmem:[%s276 + $0x38] sm:$0xff] %v974
        %1017 = vst [vmem:[%s276 + $0x40] sm:$0xff] %v979
        %1018 = vst [vmem:[%s276 + $0x48] sm:$0xff] %v982
        %1019 = vst [vmem:[%s276 + $0x50] sm:$0xff] %v987
        %1020 = vst [vmem:[%s276 + $0x58] sm:$0xff] %v990
        %1021 = vst [vmem:[%s276 + $0x60] sm:$0xff] %v995
        %1022 = vst [vmem:[%s276 + $0x68] sm:$0xff] %v998
        %1023 = vst [vmem:[%s276 + $0x70] sm:$0xff] %v1003
        %1024 = vst [vmem:[%s276 + $0x78] sm:$0xff] %v1006
        %v1025 = vlaneseq
        %v1026 = vshrl.u32 %v1025, 7
        %v1027 = vadd.s32 %v1026, 8
        %v1028 = vadd.s32 %v1026, 16
        %v1029 = vadd.s32 %v1026, 24
        %v1030 = vadd.s32 %v1026, 32
        %v1031 = vadd.s32 %v1026, 40
        %v1032 = vadd.s32 %v1026, 48
        %v1033 = vadd.s32 %v1026, 56
        %v1034 = vadd.s32 %v1026, 64
        %v1035 = vadd.s32 %v1026, 72
        %v1036 = vadd.s32 %v1026, 80
        %v1037 = vadd.s32 %v1026, 88
        %v1038 = vadd.s32 %v1026, 96
        %v1039 = vadd.s32 %v1026, 104
        %v1040 = vadd.s32 %v1026, 112
        %v1041 = vadd.s32 %v1026, 120
        %s1042 = smul.u32 %s27, 128
        %v1043 = vstv %s1042
        %v1044 = vadd.s32 %v1026, %v1043
        %v1045 = vadd.s32 %v1027, %v1043
        %v1046 = vadd.s32 %v1028, %v1043
        %v1047 = vadd.s32 %v1029, %v1043
        %v1048 = vadd.s32 %v1030, %v1043
        %v1049 = vadd.s32 %v1031, %v1043
        %v1050 = vadd.s32 %v1032, %v1043
        %v1051 = vadd.s32 %v1033, %v1043
        %v1052 = vadd.s32 %v1034, %v1043
        %v1053 = vadd.s32 %v1035, %v1043
        %v1054 = vadd.s32 %v1036, %v1043
        %v1055 = vadd.s32 %v1037, %v1043
        %v1056 = vadd.s32 %v1038, %v1043
        %v1057 = vadd.s32 %v1039, %v1043
        %v1058 = vadd.s32 %v1040, %v1043
        %v1059 = vadd.s32 %v1041, %v1043
        %vm1060 = vcmp.lt.s32.totalorder %v1044, 300
        %vm1061 = vcmp.lt.s32.totalorder %v1045, 300
        %vm1062 = vcmp.lt.s32.totalorder %v1046, 300
        %vm1063 = vcmp.lt.s32.totalorder %v1047, 300
        %vm1064 = vcmp.lt.s32.totalorder %v1048, 300
        %vm1065 = vcmp.lt.s32.totalorder %v1049, 300
        %vm1066 = vcmp.lt.s32.totalorder %v1050, 300
        %vm1067 = vcmp.lt.s32.totalorder %v1051, 300
        %vm1068 = vcmp.lt.s32.totalorder %v1052, 300
        %vm1069 = vcmp.lt.s32.totalorder %v1053, 300
        %vm1070 = vcmp.lt.s32.totalorder %v1054, 300
        %vm1071 = vcmp.lt.s32.totalorder %v1055, 300
        %vm1072 = vcmp.lt.s32.totalorder %v1056, 300
        %vm1073 = vcmp.lt.s32.totalorder %v1057, 300
        %vm1074 = vcmp.lt.s32.totalorder %v1058, 300
        %vm1075 = vcmp.lt.s32.totalorder %v1059, 300
        %v1076 = vsel %vm1060, 1, 0
        %v1077 = vsel %vm1061, 1, 0
        %v1078 = vsel %vm1062, 1, 0
        %v1079 = vsel %vm1063, 1, 0
        %v1080 = vsel %vm1064, 1, 0
        %v1081 = vsel %vm1065, 1, 0
        %v1082 = vsel %vm1066, 1, 0
        %v1083 = vsel %vm1067, 1, 0
        %v1084 = vsel %vm1068, 1, 0
        %v1085 = vsel %vm1069, 1, 0
        %v1086 = vsel %vm1070, 1, 0
        %v1087 = vsel %vm1071, 1, 0
        %v1088 = vsel %vm1072, 1, 0
        %v1089 = vsel %vm1073, 1, 0
        %v1090 = vsel %vm1074, 1, 0
        %v1091 = vsel %vm1075, 1, 0
        %v1092 = vcvt.s32.f32 %v1076
        %v1093 = vcvt.s32.f32 %v1077
        %v1094 = vcvt.s32.f32 %v1078
        %v1095 = vcvt.s32.f32 %v1079
        %v1096 = vcvt.s32.f32 %v1080
        %v1097 = vcvt.s32.f32 %v1081
        %v1098 = vcvt.s32.f32 %v1082
        %v1099 = vcvt.s32.f32 %v1083
        %v1100 = vcvt.s32.f32 %v1084
        %v1101 = vcvt.s32.f32 %v1085
        %v1102 = vcvt.s32.f32 %v1086
        %v1103 = vcvt.s32.f32 %v1087
        %v1104 = vcvt.s32.f32 %v1088
        %v1105 = vcvt.s32.f32 %v1089
        %v1106 = vcvt.s32.f32 %v1090
        %v1107 = vcvt.s32.f32 %v1091
        %v1108 = vmul.f32 %v947, %v1092
        %v1109 = vmul.f32 %v950, %v1093
        %v1110 = vmul.f32 %v955, %v1094
        %v1111 = vmul.f32 %v958, %v1095
        %v1112 = vmul.f32 %v963, %v1096
        %v1113 = vmul.f32 %v966, %v1097
        %v1114 = vmul.f32 %v971, %v1098
        %v1115 = vmul.f32 %v974, %v1099
        %v1116 = vmul.f32 %v979, %v1100
        %v1117 = vmul.f32 %v982, %v1101
        %v1118 = vmul.f32 %v987, %v1102
        %v1119 = vmul.f32 %v990, %v1103
        %v1120 = vmul.f32 %v995, %v1104
        %v1121 = vmul.f32 %v998, %v1105
        %v1122 = vmul.f32 %v1003, %v1106
        %v1123 = vmul.f32 %v1006, %v1107
        %v1124 = vadd.f32 %v1108, %v1109
        %v1125 = vadd.f32 %v1124, %v1110
        %v1126 = vadd.f32 %v1125, %v1111
        %v1127 = vadd.f32 %v1126, %v1112
        %v1128 = vadd.f32 %v1127, %v1113
        %v1129 = vadd.f32 %v1128, %v1114
        %v1130 = vadd.f32 %v1129, %v1115
        %v1131 = vadd.f32 %v1130, %v1116
        %v1132 = vadd.f32 %v1131, %v1117
        %v1133 = vadd.f32 %v1132, %v1118
        %v1134 = vadd.f32 %v1133, %v1119
        %v1135 = vadd.f32 %v1134, %v1120
        %v1136 = vadd.f32 %v1135, %v1121
        %v1137 = vadd.f32 %v1136, %v1122
        %v1138 = vadd.f32 %v1137, %v1123
        %v1139 = vrot.slane %v1138, 4
        %v1140 = vadd.f32 %v1138, %v1139
        %v1141 = vrot.slane %v1140, 2
        %v1142 = vadd.f32 %v1140, %v1141
        %v1143 = vrot.slane %v1142, 1
        %v1144 = vadd.f32 %v1142, %v1143
        %v1145 = vmul.f32 %v1108, %v1108
        %v1146 = vmul.f32 %v1109, %v1109
        %v1147 = vmul.f32 %v1110, %v1110
        %v1148 = vmul.f32 %v1111, %v1111
        %v1149 = vmul.f32 %v1112, %v1112
        %v1150 = vmul.f32 %v1113, %v1113
        %v1151 = vmul.f32 %v1114, %v1114
        %v1152 = vmul.f32 %v1115, %v1115
        %v1153 = vmul.f32 %v1116, %v1116
        %v1154 = vmul.f32 %v1117, %v1117
        %v1155 = vmul.f32 %v1118, %v1118
        %v1156 = vmul.f32 %v1119, %v1119
        %v1157 = vmul.f32 %v1120, %v1120
        %v1158 = vmul.f32 %v1121, %v1121
        %v1159 = vmul.f32 %v1122, %v1122
        %v1160 = vmul.f32 %v1123, %v1123
        %v1161 = vadd.f32 %v1145, %v1146
        %v1162 = vadd.f32 %v1161, %v1147
        %v1163 = vadd.f32 %v1162, %v1148
        %v1164 = vadd.f32 %v1163, %v1149
        %v1165 = vadd.f32 %v1164, %v1150
        %v1166 = vadd.f32 %v1165, %v1151
        %v1167 = vadd.f32 %v1166, %v1152
        %v1168 = vadd.f32 %v1167, %v1153
        %v1169 = vadd.f32 %v1168, %v1154
        %v1170 = vadd.f32 %v1169, %v1155
        %v1171 = vadd.f32 %v1170, %v1156
        %v1172 = vadd.f32 %v1171, %v1157
        %v1173 = vadd.f32 %v1172, %v1158
        %v1174 = vadd.f32 %v1173, %v1159
        %v1175 = vadd.f32 %v1174, %v1160
        %v1176 = vrot.slane %v1175, 4
        %v1177 = vadd.f32 %v1175, %v1176
        %v1178 = vrot.slane %v1177, 2
        %v1179 = vadd.f32 %v1177, %v1178
        %v1180 = vrot.slane %v1179, 1
        %v1181 = vadd.f32 %v1179, %v1180
        %vm1182 = vcmask 1040384
        %v1183 = vsel %vm1182, %v1144, %v1181
        %1184 = vst [vmem:[%s283] sm:$0x3] %v1183
        %s1185 = sand.u32 %s124, 1
        %s1186 = scalar_lea.sflag [#allocation4], %s1185
        %s1187 = sand.u32 %s124, 1
        %s1188 = smul.addr %s1187, 128
        %s1189 = scalar_lea.vmem [#allocation8], %s1188
        %s1190 = sand.u32 %s150, 1
        %s1191 = scalar_lea.sflag [#allocation10], %s1190
        %s1192 = sand.u32 %s150, 1
        %s1193 = smul.addr %s1192, 2
        %s1194 = scalar_lea.vmem [#allocation9], %s1193
        // Predicated region
        $region49: #{tpu_custom_call.1} parent=35 // pred_check
          %p1195 = pneg %p134
        $region50: #{tpu_custom_call.1} parent=35 // pred_check_branch
          %1197 = sbr.rel (%p1195) target = $region52
        $region51: #{tpu_custom_call.1} parent=35 // pred_region
          %s1198 = smul.u32 16, %s27
          %s1200 = ssub.s32 2048, 2048
          %1201 = vsyncadd %s1186, %s1200
          %s1202 = smul.addr %s1198, 128
          %s1203 = scalar_lea.hbm %s4, %s1202
          %s1204 = sshll.u32 %s1189, 4
          %s1205 = int_to_ptr.vmem [resolvable:$true] %s1204
          %1210 = dma.vmem_to_hbm [thread:$0]  %s1205, 2048, %s1203, %s1186, 128, 128, 8
        $region52: #{tpu_custom_call.1} parent=35 // pred_fallthru
          _
        // Predicated region
        $region53: #{tpu_custom_call.1} parent=35 // pred_check
          %p1211 = pneg %p160
        $region54: #{tpu_custom_call.1} parent=35 // pred_check_branch
          %1213 = sbr.rel (%p1211) target = $region56
        $region55: #{tpu_custom_call.1} parent=35 // pred_region
          %s1215 = ssub.s32 32, 32
          %1216 = vsyncadd %s1191, %s1215
          %s1217 = smul.addr %s27, 32
          %s1218 = scalar_lea.hbm %s5, %s1217
          %s1220 = sshll.u32 %s1194, 4
          %s1221 = int_to_ptr.vmem [resolvable:$true] %s1220
          %1223 = dma.vmem_to_hbm [thread:$0]  %s1221, 32, %s1218, %s1191
        $region56: #{tpu_custom_call.1} parent=35 // pred_fallthru
          _
      $region36: #{tpu_custom_call.1} parent=5 // pred_fallthru
        _
      %p1224 = scmp.le.s32.totalorder 2, %s22
      // Predicated region
      $region57: #{tpu_custom_call.1} parent=5 // pred_check
        %p1225 = pneg %p1224
      $region58: #{tpu_custom_call.1} parent=5 // pred_check_branch
        %1227 = sbr.rel (%p1225) target = $region60
      $region59: #{tpu_custom_call.1} parent=5 // pred_region
        %s1228 = ssub.s32 %s22, 2
        // Predicated region
        $region61: #{tpu_custom_call.1} parent=59 // pred_check
          %p1229 = pneg %p140
        $region62: #{tpu_custom_call.1} parent=59 // pred_check_branch
          %1231 = sbr.rel (%p1229) target = $region64
        $region63: #{tpu_custom_call.1} parent=59 // pred_region
          %s1232 = sand.u32 %s125, 1
          %s1233 = scalar_lea.sflag [#allocation4], %s1232
          %s1234 = sand.u32 %s125, 1
          %s1235 = smul.addr %s1234, 128
          %s1236 = scalar_lea.vmem [#allocation8], %s1235
          %1237 = dma.done %s1233, 2048
        $region64: #{tpu_custom_call.1} parent=59 // pred_fallthru
          _
        // Predicated region
        $region65: #{tpu_custom_call.1} parent=59 // pred_check
          %p1238 = pneg %p166
        $region66: #{tpu_custom_call.1} parent=59 // pred_check_branch
          %1240 = sbr.rel (%p1238) target = $region68
        $region67: #{tpu_custom_call.1} parent=59 // pred_region
          %s1241 = sand.u32 %s151, 1
          %s1242 = scalar_lea.sflag [#allocation10], %s1241
          %s1243 = sand.u32 %s151, 1
          %s1244 = smul.addr %s1243, 2
          %s1245 = scalar_lea.vmem [#allocation9], %s1244
          %1246 = dma.done %s1242, 32
        $region68: #{tpu_custom_call.1} parent=59 // pred_fallthru
          _
      $region60: #{tpu_custom_call.1} parent=5 // pred_fallthru
        _
    $region6: #{tpu_custom_call.1} parent=1 // loop_footer
      %s26 = sadd.s32 1, %s22
    $region7: #{tpu_custom_call.1} parent=1 // loop_footer_branch
      %21 = sbr.rel target = $region3
    $region8: #{tpu_custom_call.1} parent=1 // loop_exit
      _
    %1247 = vsyncpa [#allocation3], 1
    %s1248 = scalar_lea.sflag [#allocation3], 1
    %1249 = vsyncpa %s1248, 1
    %1250 = vsyncpa [#allocation6], 1
    %1251 = vsyncpa [#allocation4], 1
    %s1252 = scalar_lea.sflag [#allocation4], 1
    %1253 = vsyncpa %s1252, 1
    %1254 = vsyncpa [#allocation10], 1
    %s1255 = scalar_lea.sflag [#allocation10], 1
    %1256 = vsyncpa %s1255, 1

</llo_original>
